<compile_context>
chip_gen: v5e
topology: v5e:2x2
jax: 0.10.0
libtpu: 0.0.40
codegen_flags: <defaults>
</compile_context>

<pallas_src>
import math

import jax
import jax.numpy as jnp
from jax.experimental import pallas as pl
from jax.experimental.pallas import tpu as pltpu


_FAST_PATH_MAX_BYTES = 1 << 20            # below this a plain slice beats kernel dispatch
_DEFAULT_MIN_BYTES_PER_CHUNK = 512 << 10  # don't over-chunk small slabs
_MAX_CHUNKS = 4                           # max concurrent outstanding DMAs


def _chunk_plan(item_shape, dtype, min_bytes_per_chunk):
    """Static (start, size) splits of the item's leading dim for concurrent DMAs.

    Returns None when a single DMA is best (small slab, or nothing to split).
    """
    if len(item_shape) == 0 or item_shape[0] <= 1:
        return None
    itemsize = jnp.dtype(dtype).itemsize
    slab_bytes = itemsize * math.prod(item_shape)
    if slab_bytes < 2 * min_bytes_per_chunk:
        return None
    lead = item_shape[0]
    row_bytes = slab_bytes // lead
    rows_per_chunk = max(1, -(-min_bytes_per_chunk // row_bytes))  # ceil div
    num_chunks = min(_MAX_CHUNKS, max(1, lead // rows_per_chunk))
    if num_chunks <= 1:
        return None
    base, rem = divmod(lead, num_chunks)
    chunks, start = [], 0
    for c in range(num_chunks):
        size = base + (1 if c < rem else 0)
        chunks.append((start, size))
        start += size
    return tuple(chunks)


def _copy_item(x_hbm, o_hbm, copy_sems, idx, chunks):
    """Issue the HBM->HBM DMA(s) copying stacked[idx] into the output slab."""
    if chunks is None:
        cp = pltpu.make_async_copy(x_hbm.at[idx], o_hbm, copy_sems.at[0])
        cp.start()
        cp.wait()
        return
    # Start all chunk DMAs (concurrent descriptors), then wait on all of them.
    cps = []
    for c, (start, size) in enumerate(chunks):
        cp = pltpu.make_async_copy(
            x_hbm.at[idx, pl.ds(start, size)],
            o_hbm.at[pl.ds(start, size)],
            copy_sems.at[c],
        )
        cp.start()
        cps.append(cp)
    for cp in cps:
        cp.wait()


def _make_dynamic_kernel(chunks):
    # idx comes in via scalar prefetch (SMEM).
    def kernel(idx_ref, x_hbm, o_hbm, copy_sems):
        _copy_item(x_hbm, o_hbm, copy_sems, idx_ref[0], chunks)
    return kernel


def _make_static_kernel(idx, chunks):
    # Compile-time index: no scalar prefetch, static DMA source slice.
    def kernel(x_hbm, o_hbm, copy_sems):
        _copy_item(x_hbm, o_hbm, copy_sems, idx, chunks)
    return kernel


def select_item(stacked, item_index, *, force_kernel=False,
                min_bytes_per_chunk=_DEFAULT_MIN_BYTES_PER_CHUNK):
    """Pallas equivalent of SelectItem(item_index)(stacked).

    stacked:    jnp array of shape (num_items, ...) -- a stack of tensors.
    item_index: python int (static) or traced int32 scalar (dynamic).
    """
    stacked = jnp.asarray(stacked)
    n = stacked.shape[0]
    item_shape = stacked.shape[1:]
    slab_bytes = stacked.dtype.itemsize * math.prod(item_shape)

    static_index = isinstance(item_index, int) and not isinstance(item_index, bool)

    # ---- Fast path: static index or tiny slab => plain (dynamic-)slice. ----
    if not force_kernel and (static_index or slab_bytes < _FAST_PATH_MAX_BYTES):
        if static_index:
            return stacked[item_index]
        idx = jnp.clip(jnp.asarray(item_index, jnp.int32), 0, n - 1)
        return jax.lax.dynamic_index_in_dim(stacked, idx, axis=0, keepdims=False)

    chunks = _chunk_plan(item_shape, stacked.dtype, min_bytes_per_chunk)
    num_sems = 1 if chunks is None else len(chunks)
    out_shape = jax.ShapeDtypeStruct(item_shape, stacked.dtype)

    if static_index:
        # Mirror the PyTorch module: a bad static index raises (at trace time).
        if not (-n <= item_index < n):
            raise IndexError(
                f"SelectItem index {item_index} out of range for {n} items")
        idx_static = item_index if item_index >= 0 else item_index + n
        return pl.pallas_call(
            _make_static_kernel(idx_static, chunks),
            out_shape=out_shape,
            in_specs=[pl.BlockSpec(memory_space=pl.ANY)],
            out_specs=pl.BlockSpec(memory_space=pl.ANY),
            scratch_shapes=[pltpu.SemaphoreType.DMA((num_sems,))],
            compiler_params=pltpu.CompilerParams(has_side_effects=True),
        )(stacked)

    # Dynamic index: clamp (manual-DMA path has no runtime bounds check; an
    # out-of-range index would read garbage or fault the chip).
    idx = jnp.clip(jnp.asarray(item_index, jnp.int32), 0, n - 1).reshape((1,))
    return pl.pallas_call(
        _make_dynamic_kernel(chunks),
        out_shape=out_shape,
        grid_spec=pltpu.PrefetchScalarGridSpec(
            num_scalar_prefetch=1,
            grid=(1,),
            in_specs=[pl.BlockSpec(memory_space=pl.ANY)],
            out_specs=pl.BlockSpec(memory_space=pl.ANY),
            scratch_shapes=[pltpu.SemaphoreType.DMA((num_sems,))],
        ),
        compiler_params=pltpu.CompilerParams(
            dimension_semantics=("arbitrary",),
            has_side_effects=True,
        ),
    )(idx, stacked)


if __name__ == "__main__":
    key = jax.random.PRNGKey(0)
    # Small shapes consistent with the LSTM-output use case; hidden is a
    # multiple of 128 so the selected slab is lane/tile aligned.
    num_items, batch, seq, hidden = 3, 2, 8, 128
    stacked = jax.random.normal(
        key, (num_items, batch, seq, hidden), dtype=jnp.float32)

    item_index = 1  # SelectItem(1)
    ref = stacked[item_index]

    # 1) Fast path: static index -> plain slice, no kernel dispatch.
    out_fast = jax.block_until_ready(select_item(stacked, item_index))
    assert out_fast.shape == ref.shape and out_fast.dtype == ref.dtype
    assert bool(jnp.all(out_fast == ref)), "fast-path mismatch"

    # 2) Pallas kernel, static index (no scalar prefetch), single HBM->HBM DMA.
    out_static = jax.block_until_ready(
        select_item(stacked, item_index, force_kernel=True))
    assert out_static.shape == ref.shape and out_static.dtype == ref.dtype
    assert bool(jnp.all(out_static == ref)), "static-kernel mismatch"

    # 3) Pallas kernel, dynamic (traced) index via scalar prefetch, with the
    #    chunk threshold lowered so the concurrent multi-DMA path is exercised
    #    even at these small test shapes.
    dyn_idx = jnp.int32(item_index)
    out_dyn = jax.block_until_ready(
        select_item(stacked, dyn_idx, force_kernel=True,
                    min_bytes_per_chunk=2048))
    assert out_dyn.shape == ref.shape and out_dyn.dtype == ref.dtype
    assert bool(jnp.all(out_dyn == ref)), "dynamic chunked-kernel mismatch"

    print("KERNEL_OK")
</pallas_src>

<mosaic_0001>
module attributes {stable_mosaic.version = 11 : i64} {
  func.func @kernel(%arg0: memref<3x2x8x128xf32, #tpu.memory_space<any>>, %arg1: memref<2x8x128xf32, #tpu.memory_space<any>>, %arg2: memref<1x!tpu.dma_semaphore, #tpu.memory_space<semaphore_mem>>) attributes {dimension_semantics = [], scalar_prefetch = 0 : i64, scratch_operands = 1 : i64, tpu.core_type = #tpu.core_type<tc>} {
    %c1_i32 = arith.constant 1 : i32
    %c0_i32 = arith.constant 0 : i32
    %c0_i32_0 = arith.constant 0 : i32
    %c0_i32_1 = arith.constant 0 : i32
    %c0_i32_2 = arith.constant 0 : i32
    %0 = tpu.memref_slice %arg0[%c1_i32, %c0_i32_0, %c0_i32_1, %c0_i32_2] : memref<3x2x8x128xf32, #tpu.memory_space<any>> -> memref<1x2x8x128xf32, #tpu.memory_space<any>>
    %1 = tpu.memref_squeeze %0 : memref<1x2x8x128xf32, #tpu.memory_space<any>> -> memref<2x8x128xf32, #tpu.memory_space<any>>
    %2 = tpu.memref_slice %arg2[%c0_i32] : memref<1x!tpu.dma_semaphore, #tpu.memory_space<semaphore_mem>> -> memref<1x!tpu.dma_semaphore, #tpu.memory_space<semaphore_mem>>
    %3 = tpu.memref_squeeze %2 : memref<1x!tpu.dma_semaphore, #tpu.memory_space<semaphore_mem>> -> memref<!tpu.dma_semaphore, #tpu.memory_space<semaphore_mem>>
    tpu.enqueue_dma source(%1 : memref<2x8x128xf32, #tpu.memory_space<any>>) target(%arg1 : memref<2x8x128xf32, #tpu.memory_space<any>>) target_semaphore(%3 : memref<!tpu.dma_semaphore, #tpu.memory_space<semaphore_mem>>)
    %c1_i32_3 = arith.constant 1 : i32
    %c0_i32_4 = arith.constant 0 : i32
    %c0_i32_5 = arith.constant 0 : i32
    %c0_i32_6 = arith.constant 0 : i32
    %c0_i32_7 = arith.constant 0 : i32
    %4 = tpu.memref_slice %arg0[%c1_i32_3, %c0_i32_5, %c0_i32_6, %c0_i32_7] : memref<3x2x8x128xf32, #tpu.memory_space<any>> -> memref<1x2x8x128xf32, #tpu.memory_space<any>>
    %5 = tpu.memref_squeeze %4 : memref<1x2x8x128xf32, #tpu.memory_space<any>> -> memref<2x8x128xf32, #tpu.memory_space<any>>
    %6 = tpu.memref_slice %arg2[%c0_i32_4] : memref<1x!tpu.dma_semaphore, #tpu.memory_space<semaphore_mem>> -> memref<1x!tpu.dma_semaphore, #tpu.memory_space<semaphore_mem>>
    %7 = tpu.memref_squeeze %6 : memref<1x!tpu.dma_semaphore, #tpu.memory_space<semaphore_mem>> -> memref<!tpu.dma_semaphore, #tpu.memory_space<semaphore_mem>>
    tpu.wait_dma2 semaphore(%7 : memref<!tpu.dma_semaphore, #tpu.memory_space<semaphore_mem>>) src(%5 : memref<2x8x128xf32, #tpu.memory_space<any>>) dst(%arg1 : memref<2x8x128xf32, #tpu.memory_space<any>>)
    return
  }
}

</mosaic_0001>

<llo_original>
// kernel: tpu_custom_call.1
$region0: #{tpu_custom_call.1}
  #allocation0 [shape = 'u32[]', space=smem, size = 0x4, offset = 0x4, fixed_abs, tag = 'smem constant byte address 0x4 - core index']
  #allocation1 [shape = 'u32[72,128]{1,0:T(1,128)}', space=vmem, size = 0x9000, scoped, tag = 'internal scratch']
  #allocation2 [shape = 's32[1]{0}', space=sflag, size = 0x4, scoped, tag = 'scratch operand']
  #allocation3 [shape = 's32[]', space=sflag, size = 0x4, offset = 0, fixed_abs, tag = 'sflag constant byte address 0x0 - dummy sync flag']
  #allocation4 [shape = 'u32[0]{0}', space=smem, size = 0, offset = 0, fixed_abs, tag = 'smem constant byte address 0x0 - null']
  %s0 = inlined_call_operand.hbm [shape: f32[3,2,8,128], index: 0, kind: input, shape index: {}]
  %s1 = inlined_call_operand.hbm [shape: f32[2,8,128], index: 1, kind: output, shape index: {}]
  %s2 = sld [smem:[#allocation0]]
  $region2: #{tpu_custom_call.1} parent=0
    _
  %s4 = ssub.s32 1, %s2
  %s5 = scalar_select 0, %s4, %s2
  %s6 = scalar_lea.hbm %s0, 16
  %s8 = sshll.u32 1, 14
  %s9 = sxor.u32 4294967295, %s8
  %s11 = sshll.u32 %s6, 4
  %s12 = int_to_ptr.hbm [resolvable:$true] %s11
  %s13 = sshll.u32 %s1, 4
  %s14 = int_to_ptr.hbm [resolvable:$true] %s13
  %17 = dma.general %s12, 256, %s14, [#allocation2], [#allocation3], [#allocation4], 0, 0
  %s18 = smul.u32 2, 8
  %s19 = smul.u32 %s18, 1
  %s20 = sshll.u32 %s19, 4
  %21 = dma.done [#allocation2], %s20
  %22 = vsyncmov [#allocation2]
  %s23 = vpop.sfrf %22
  %p24 = scmp.eq.s32.totalorder %s23, 0
  %p25 = pneg %p24
  %27 = shalt.err (%p25)

</llo_original>
